<compile_context>
chip_gen: v6e
topology: v6e:2x2x1
jax: 0.10.0
libtpu: 0.0.40
codegen_flags: <defaults>
</compile_context>

<pallas_src>
import functools

import jax
import jax.numpy as jnp
from jax.experimental import pallas as pl
from jax.experimental.pallas import tpu as pltpu


def _layernorm_kernel(x_ref, g_ref, b_ref, o_ref, *, eps, inv_c, c, kp):
    # x_ref block: (nb, kp*c, T) ; g_ref/b_ref: (1, c, 1)
    x = x_ref[...].astype(jnp.float32)                      # (nb, kp*c, T)
    g = g_ref[...].astype(jnp.float32)                      # (1, c, 1)
    b = b_ref[...].astype(jnp.float32)                      # (1, c, 1)

    outs = []
    for i in range(kp):                                     # static, kp <= 8
        seg = x[:, i * c:(i + 1) * c, :]                    # (nb, c, T)
        # One-pass statistics over the channel (sublane) axis.
        # NOTE: E[x^2]-E[x]^2 can lose precision when |mean| >> std; the
        # clamp below keeps it NaN-free (matches unbiased=False semantics).
        s = jnp.sum(seg, axis=1, keepdims=True)             # (nb, 1, T)
        sq = jnp.sum(seg * seg, axis=1, keepdims=True)      # (nb, 1, T)
        mean = s * inv_c
        var = jnp.maximum(sq * inv_c - mean * mean, 0.0)
        inv = jax.lax.rsqrt(var + eps)                      # (nb, 1, T)
        # Consume the (1,T) and (1,c,1) broadcasts in-stream; no (c,T) temp.
        outs.append(((seg - mean) * inv) * g + b)

    y = outs[0] if kp == 1 else jnp.concatenate(outs, axis=1)
    o_ref[...] = y.astype(o_ref.dtype)


def _round_up(v, m):
    return -(-v // m) * m


def layer_norm_nchw(x, g, b, eps=1e-5):
    """x: (N, C, H, W); g, b: (1, C, 1, 1) — matches the PyTorch module."""
    N, C, H, W = x.shape
    HW = H * W
    itemsize = jnp.dtype(x.dtype).itemsize

    # --- sublane packing for small C (fill the 8 f32 sublanes) -------------
    kp = 1
    if C < 8:
        kp = max(1, 8 // C)
        while kp > 1 and N % kp != 0:
            kp -= 1
    C_p = kp * C
    N_p = N // kp

    # --- pad HW up to a multiple of 128 (lane-dense, bounded blocks) -------
    hw128 = _round_up(HW, 128)

    # --- generation-aware VMEM / block budgets ------------------------------
    try:
        vmem_phys = int(getattr(pltpu.get_tpu_info(), "vmem_capacity_bytes",
                                128 << 20))
    except Exception:
        vmem_phys = 128 << 20
    if vmem_phys <= (64 << 20):          # v7x: 64 MiB physical -> ~48 MiB scoped
        scoped_cap = 48 << 20
    else:                                # v5e / v6e: 128 MiB physical
        scoped_cap = 64 << 20
    margin = 4 << 20
    # VMEM bytes consumed per input-block byte: 2x input + 2x output double
    # buffers (at input dtype) plus ~3 full f32 intermediates in the kernel.
    factor = 4.0 + 12.0 / itemsize
    max_block_bytes = int(min(8 << 20, (scoped_cap - margin) / factor))
    max_block_bytes = max(max_block_bytes, 1 << 20)

    # --- pick the spatial tile: largest 128-multiple divisor of hw128 under
    #     the byte budget (no lane cap other than bytes) ---------------------
    lane_cap = (max_block_bytes // max(C_p * itemsize, 1)) // 128 * 128
    lane_cap = max(128, min(hw128, lane_cap))
    hw_tile = 128
    t = lane_cap
    while t >= 128:
        if hw128 % t == 0:
            hw_tile = t
            break
        t -= 128

    # --- batch blocking when a full-HW single-image block is still small ----
    block_bytes = C_p * hw_tile * itemsize
    nb = 1
    min_block = 1 << 20
    if block_bytes < min_block and hw_tile == hw128 and N_p > 1:
        best = 1
        for d in range(1, N_p + 1):
            if N_p % d != 0:
                continue
            if d * block_bytes > max_block_bytes:
                break
            best = d
            if d * block_bytes >= min_block:
                break
        nb = best
    block_bytes *= nb

    # --- VMEM limit: double-buffered in/out + f32 temps + params + margin ---
    needed = int(block_bytes * factor) + 2 * C * 4 + (2 << 20)
    vmem_limit = int(min(max(needed, 16 << 20), scoped_cap))

    # --- data prep -----------------------------------------------------------
    x2 = x.reshape(N, C, HW)
    if hw128 != HW:
        x2 = jnp.pad(x2, ((0, 0), (0, 0), (0, hw128 - HW)))
    x2 = x2.reshape(N_p, C_p, hw128)
    g3 = g.reshape(1, C, 1)
    b3 = b.reshape(1, C, 1)

    grid = (N_p // nb, hw128 // hw_tile)
    kernel = functools.partial(
        _layernorm_kernel, eps=float(eps), inv_c=1.0 / float(C), c=C, kp=kp)

    out = pl.pallas_call(
        kernel,
        out_shape=jax.ShapeDtypeStruct((N_p, C_p, hw128), x.dtype),
        grid_spec=pltpu.PrefetchScalarGridSpec(
            num_scalar_prefetch=0,
            grid=grid,
            in_specs=[
                pl.BlockSpec((nb, C_p, hw_tile), lambda n, s: (n, 0, s)),
                pl.BlockSpec((1, C, 1), lambda n, s: (0, 0, 0)),
                pl.BlockSpec((1, C, 1), lambda n, s: (0, 0, 0)),
            ],
            out_specs=pl.BlockSpec((nb, C_p, hw_tile), lambda n, s: (n, 0, s)),
        ),
        compiler_params=pltpu.CompilerParams(
            dimension_semantics=("parallel", "parallel"),
            vmem_limit_bytes=vmem_limit,
        ),
    )(x2, g3, b3)

    out = out.reshape(N, C, hw128)
    if hw128 != HW:
        out = out[:, :, :HW]
    return out.reshape(N, C, H, W)


def layer_norm_ref(x, g, b, eps=1e-5):
    mean = jnp.mean(x, axis=1, keepdims=True)
    var = jnp.mean((x - mean) ** 2, axis=1, keepdims=True)
    return (x - mean) / jnp.sqrt(var + eps) * g + b


if __name__ == "__main__":
    key = jax.random.PRNGKey(0)

    # Case 1: matches the module init (gamma=1, beta=0); exercises the
    # small-C sublane-packing path (C=4 -> kp=2).
    N, C, H, W = 2, 4, 16, 16
    k1, k2, k3, k4 = jax.random.split(key, 4)
    x = jax.random.normal(k1, (N, C, H, W), dtype=jnp.float32)
    g = jnp.ones((1, C, 1, 1), dtype=jnp.float32)
    b = jnp.zeros((1, C, 1, 1), dtype=jnp.float32)
    y = jax.block_until_ready(layer_norm_nchw(x, g, b))
    y_ref = layer_norm_ref(x, g, b)
    assert y.shape == (N, C, H, W)
    assert jnp.allclose(y, y_ref, atol=2e-5, rtol=1e-4)

    # Case 2: non-multiple-of-128 spatial extent (padding path) and
    # non-trivial gamma/beta.
    N2, C2, H2, W2 = 3, 5, 7, 9
    x2 = jax.random.normal(k2, (N2, C2, H2, W2), dtype=jnp.float32) * 3.0 + 0.5
    g2 = jax.random.normal(k3, (1, C2, 1, 1), dtype=jnp.float32)
    b2 = jax.random.normal(k4, (1, C2, 1, 1), dtype=jnp.float32)
    y2 = jax.block_until_ready(layer_norm_nchw(x2, g2, b2))
    y2_ref = layer_norm_ref(x2, g2, b2)
    assert y2.shape == (N2, C2, H2, W2)
    assert jnp.allclose(y2, y2_ref, atol=2e-5, rtol=1e-4)

    print("KERNEL_OK")
</pallas_src>

<mosaic_0001>
module attributes {stable_mosaic.version = 11 : i64} {
  func.func @_layernorm_kernel(%arg0: i32, %arg1: i32, %arg2: memref<1x8x256xf32, #tpu.memory_space<vmem>>, %arg3: memref<1x4x1xf32, #tpu.memory_space<vmem>>, %arg4: memref<1x4x1xf32, #tpu.memory_space<vmem>>, %arg5: memref<1x8x256xf32, #tpu.memory_space<vmem>>) attributes {dimension_semantics = [#tpu.dimension_semantics<parallel>, #tpu.dimension_semantics<parallel>], iteration_bounds = array<i64: 1, 1>, scalar_prefetch = 0 : i64, scratch_operands = 0 : i64, tpu.core_type = #tpu.core_type<tc>, window_params = [{transform_indices = @transform_0, window_bounds = array<i64: 1, 8, 256>}, {pipeline_mode = #tpu.pipeline_mode<synchronous>, transform_indices = @transform_1, window_bounds = array<i64: 1, 4, 1>}, {pipeline_mode = #tpu.pipeline_mode<synchronous>, transform_indices = @transform_2, window_bounds = array<i64: 1, 4, 1>}, {transform_indices = @transform_3, window_bounds = array<i64: 1, 8, 256>}]} {
    %c0 = arith.constant 0 : index
    %c0_0 = arith.constant 0 : index
    %c0_1 = arith.constant 0 : index
    %0 = vector.load %arg2[%c0, %c0_0, %c0_1] : memref<1x8x256xf32, #tpu.memory_space<vmem>>, vector<1x8x256xf32>
    %c0_2 = arith.constant 0 : index
    %c0_3 = arith.constant 0 : index
    %c0_4 = arith.constant 0 : index
    %1 = vector.load %arg3[%c0_2, %c0_3, %c0_4] : memref<1x4x1xf32, #tpu.memory_space<vmem>>, vector<1x4x1xf32>
    %c0_5 = arith.constant 0 : index
    %c0_6 = arith.constant 0 : index
    %c0_7 = arith.constant 0 : index
    %2 = vector.load %arg4[%c0_5, %c0_6, %c0_7] : memref<1x4x1xf32, #tpu.memory_space<vmem>>, vector<1x4x1xf32>
    %3 = vector.extract_strided_slice %0 {offsets = [0, 0, 0], sizes = [1, 4, 256], strides = [1, 1, 1]} : vector<1x8x256xf32> to vector<1x4x256xf32>
    %cst = arith.constant dense<0.000000e+00> : vector<1x256xf32>
    %4 = vector.multi_reduction <add>, %3, %cst [1] : vector<1x4x256xf32> to vector<1x256xf32>
    %5 = vector.shape_cast %4 : vector<1x256xf32> to vector<1x1x256xf32>
    %6 = arith.mulf %3, %3 : vector<1x4x256xf32>
    %cst_8 = arith.constant dense<0.000000e+00> : vector<1x256xf32>
    %7 = vector.multi_reduction <add>, %6, %cst_8 [1] : vector<1x4x256xf32> to vector<1x256xf32>
    %8 = vector.shape_cast %7 : vector<1x256xf32> to vector<1x1x256xf32>
    %cst_9 = arith.constant 2.500000e-01 : f32
    %9 = vector.broadcast %cst_9 : f32 to vector<1x1x256xf32>
    %10 = arith.mulf %5, %9 : vector<1x1x256xf32>
    %cst_10 = arith.constant 2.500000e-01 : f32
    %11 = vector.broadcast %cst_10 : f32 to vector<1x1x256xf32>
    %12 = arith.mulf %8, %11 : vector<1x1x256xf32>
    %13 = arith.mulf %10, %10 : vector<1x1x256xf32>
    %14 = arith.subf %12, %13 : vector<1x1x256xf32>
    %cst_11 = arith.constant 0.000000e+00 : f32
    %15 = vector.broadcast %cst_11 : f32 to vector<1x1x256xf32>
    %16 = arith.maximumf %14, %15 : vector<1x1x256xf32>
    %cst_12 = arith.constant 9.99999974E-6 : f32
    %17 = vector.broadcast %cst_12 : f32 to vector<1x1x256xf32>
    %18 = arith.addf %16, %17 : vector<1x1x256xf32>
    %19 = math.rsqrt %18 : vector<1x1x256xf32>
    %20 = vector.broadcast %10 : vector<1x1x256xf32> to vector<1x4x256xf32>
    %21 = arith.subf %3, %20 : vector<1x4x256xf32>
    %22 = vector.broadcast %19 : vector<1x1x256xf32> to vector<1x4x256xf32>
    %23 = arith.mulf %21, %22 : vector<1x4x256xf32>
    %24 = vector.broadcast %1 : vector<1x4x1xf32> to vector<1x4x256xf32>
    %25 = arith.mulf %23, %24 : vector<1x4x256xf32>
    %26 = vector.broadcast %2 : vector<1x4x1xf32> to vector<1x4x256xf32>
    %27 = arith.addf %25, %26 : vector<1x4x256xf32>
    %28 = vector.extract_strided_slice %0 {offsets = [0, 4, 0], sizes = [1, 4, 256], strides = [1, 1, 1]} : vector<1x8x256xf32> to vector<1x4x256xf32>
    %cst_13 = arith.constant dense<0.000000e+00> : vector<1x256xf32>
    %29 = vector.multi_reduction <add>, %28, %cst_13 [1] : vector<1x4x256xf32> to vector<1x256xf32>
    %30 = vector.shape_cast %29 : vector<1x256xf32> to vector<1x1x256xf32>
    %31 = arith.mulf %28, %28 : vector<1x4x256xf32>
    %cst_14 = arith.constant dense<0.000000e+00> : vector<1x256xf32>
    %32 = vector.multi_reduction <add>, %31, %cst_14 [1] : vector<1x4x256xf32> to vector<1x256xf32>
    %33 = vector.shape_cast %32 : vector<1x256xf32> to vector<1x1x256xf32>
    %cst_15 = arith.constant 2.500000e-01 : f32
    %34 = vector.broadcast %cst_15 : f32 to vector<1x1x256xf32>
    %35 = arith.mulf %30, %34 : vector<1x1x256xf32>
    %cst_16 = arith.constant 2.500000e-01 : f32
    %36 = vector.broadcast %cst_16 : f32 to vector<1x1x256xf32>
    %37 = arith.mulf %33, %36 : vector<1x1x256xf32>
    %38 = arith.mulf %35, %35 : vector<1x1x256xf32>
    %39 = arith.subf %37, %38 : vector<1x1x256xf32>
    %cst_17 = arith.constant 0.000000e+00 : f32
    %40 = vector.broadcast %cst_17 : f32 to vector<1x1x256xf32>
    %41 = arith.maximumf %39, %40 : vector<1x1x256xf32>
    %cst_18 = arith.constant 9.99999974E-6 : f32
    %42 = vector.broadcast %cst_18 : f32 to vector<1x1x256xf32>
    %43 = arith.addf %41, %42 : vector<1x1x256xf32>
    %44 = math.rsqrt %43 : vector<1x1x256xf32>
    %45 = vector.broadcast %35 : vector<1x1x256xf32> to vector<1x4x256xf32>
    %46 = arith.subf %28, %45 : vector<1x4x256xf32>
    %47 = vector.broadcast %44 : vector<1x1x256xf32> to vector<1x4x256xf32>
    %48 = arith.mulf %46, %47 : vector<1x4x256xf32>
    %49 = vector.broadcast %1 : vector<1x4x1xf32> to vector<1x4x256xf32>
    %50 = arith.mulf %48, %49 : vector<1x4x256xf32>
    %51 = vector.broadcast %2 : vector<1x4x1xf32> to vector<1x4x256xf32>
    %52 = arith.addf %50, %51 : vector<1x4x256xf32>
    %53 = tpu.concatenate %27, %52 in 1 : vector<1x4x256xf32>, vector<1x4x256xf32> -> vector<1x8x256xf32>
    %c0_19 = arith.constant 0 : index
    %c0_20 = arith.constant 0 : index
    %c0_21 = arith.constant 0 : index
    %54 = vector.load %arg5[%c0_19, %c0_20, %c0_21] : memref<1x8x256xf32, #tpu.memory_space<vmem>>, vector<1x8x256xf32>
    tpu.vector_store %arg5[%c0_19, %c0_20, %c0_21], %53 {strides = array<i32>} : memref<1x8x256xf32, #tpu.memory_space<vmem>>, vector<1x8x256xf32>,
    return
  }
  func.func @transform_0(%arg0: i32, %arg1: i32) -> (i32, i32, i32) {
    %c0_i32 = arith.constant 0 : i32
    %c0_i32_0 = arith.constant 0 : i32
    return %arg0, %c0_i32, %arg1 : i32, i32, i32
  }
  func.func @transform_1(%arg0: i32, %arg1: i32) -> (i32, i32, i32) {
    %c0_i32 = arith.constant 0 : i32
    %c0_i32_0 = arith.constant 0 : i32
    %c0_i32_1 = arith.constant 0 : i32
    %c0_i32_2 = arith.constant 0 : i32
    return %c0_i32, %c0_i32_0, %c0_i32_1 : i32, i32, i32
  }
  func.func @transform_2(%arg0: i32, %arg1: i32) -> (i32, i32, i32) {
    %c0_i32 = arith.constant 0 : i32
    %c0_i32_0 = arith.constant 0 : i32
    %c0_i32_1 = arith.constant 0 : i32
    %c0_i32_2 = arith.constant 0 : i32
    return %c0_i32, %c0_i32_0, %c0_i32_1 : i32, i32, i32
  }
  func.func @transform_3(%arg0: i32, %arg1: i32) -> (i32, i32, i32) {
    %c0_i32 = arith.constant 0 : i32
    %c0_i32_0 = arith.constant 0 : i32
    return %arg0, %c0_i32, %arg1 : i32, i32, i32
  }
}

</mosaic_0001>

<llo_original>
// kernel: tpu_custom_call.1
$region0: #{tpu_custom_call.1}
  #allocation0 [shape = 'u32[]', space=smem, size = 0x4, offset = 0x4, fixed_abs, tag = 'smem constant byte address 0x4 - core index']
  #allocation1 [shape = 'u32[144,128]{1,0:T(1,128)}', space=vmem, size = 0x12000, scoped, tag = 'internal scratch']
  %s0 = inlined_call_operand.hbm [shape: f32[1,8,256], index: 0, kind: input, shape index: {}]
  %s1 = inlined_call_operand.vmem [shape: f32[1,4,1], index: 1, kind: input, shape index: {}]
  %s2 = inlined_call_operand.vmem [shape: f32[1,4,1], index: 2, kind: input, shape index: {}]
  %s3 = inlined_call_operand.hbm [shape: f32[1,8,256], index: 3, kind: output, shape index: {}]
  %s4 = sld [smem:[#allocation0]]
  $region26: #{tpu_custom_call.1} parent=0
    _
  %s6 = ssub.s32 1, %s4
  %s7 = scalar_select 0, %s6, %s4
  $region1: #{tpu_custom_call.1} parent=0
    #allocation2 [shape = 'u8[8192]{0}', space=vmem, size = 0x2000, scoped, tag = 'input window, operand 0, single buffered']
    #allocation3 [shape = 's32[1]{0}', space=sflag, size = 0x4, scoped, tag = 'scoped memory for tpu_custom_call.1']
    #allocation4 [shape = 's32[1]{0}', space=sflag, size = 0x4, scoped, tag = 'scoped memory for tpu_custom_call.1']
    #allocation5 [shape = 'u8[8192]{0}', space=vmem, size = 0x2000, scoped, tag = 'output window, operand 0, single buffered']
    %8 = vsyncpa [#allocation3], 0
    %9 = vsyncpa [#allocation4], 0
    // Predicated region
    $region2: #{tpu_custom_call.1} parent=1 // pred_check
      _
    $region3: #{tpu_custom_call.1} parent=1 // pred_check_branch
      %11 = sbr.rel (0) target = $region5
    $region4: #{tpu_custom_call.1} parent=1 // pred_region
      %s13 = ssub.s32 256, 256
      %14 = vsyncadd [#allocation3], %s13
      %s16 = sshll.u32 [#allocation2], 4
      %s17 = int_to_ptr.vmem [resolvable:$true] %s16
      %19 = dma.hbm_to_vmem [thread:$0]  %s0, 256, %s17, [#allocation3]
    $region5: #{tpu_custom_call.1} parent=1 // pred_fallthru
      _
    // Predicated region
    $region6: #{tpu_custom_call.1} parent=1 // pred_check
      _
    $region7: #{tpu_custom_call.1} parent=1 // pred_check_branch
      %21 = sbr.rel (0) target = $region9
    $region8: #{tpu_custom_call.1} parent=1 // pred_region
      _
    $region9: #{tpu_custom_call.1} parent=1 // pred_fallthru
      _
    // Predicated region
    $region10: #{tpu_custom_call.1} parent=1 // pred_check
      _
    $region11: #{tpu_custom_call.1} parent=1 // pred_check_branch
      %23 = sbr.rel (0) target = $region13
    $region12: #{tpu_custom_call.1} parent=1 // pred_region
      _
    $region13: #{tpu_custom_call.1} parent=1 // pred_fallthru
      _
    // Predicated region
    $region14: #{tpu_custom_call.1} parent=1 // pred_check
      _
    $region15: #{tpu_custom_call.1} parent=1 // pred_check_branch
      %25 = sbr.rel (0) target = $region17
    $region16: #{tpu_custom_call.1} parent=1 // pred_region
      %26 = dma.done [#allocation3], 256
    $region17: #{tpu_custom_call.1} parent=1 // pred_fallthru
      _
    %v27 = vld [vmem:[#allocation2] sm:$0xff]
    %v28 = vld [vmem:[#allocation2 + $0x8] sm:$0xff]
    %v29 = vld [vmem:[%s1] sm:$0xf]
    %v30 = vld [vmem:[%s2] sm:$0xf]
    %vm31 = vcmask 1043456
    %v32 = vsel %vm31, %v27, 0.0
    %v33 = vrot.slane %v32, 4
    %v34 = vadd.f32 %v32, %v33
    %v35 = vrot.slane %v34, 2
    %v36 = vadd.f32 %v34, %v35
    %v37 = vrot.slane %v36, 1
    %v38 = vadd.f32 %v36, %v37
    %v39 = vsel %vm31, %v28, 0.0
    %v40 = vrot.slane %v39, 4
    %v41 = vadd.f32 %v39, %v40
    %v42 = vrot.slane %v41, 2
    %v43 = vadd.f32 %v41, %v42
    %v44 = vrot.slane %v43, 1
    %v45 = vadd.f32 %v43, %v44
    %v46 = vmul.f32 %v27, %v27
    %v47 = vmul.f32 %v28, %v28
    %v48 = vsel %vm31, %v46, 0.0
    %v49 = vrot.slane %v48, 4
    %v50 = vadd.f32 %v48, %v49
    %v51 = vrot.slane %v50, 2
    %v52 = vadd.f32 %v50, %v51
    %v53 = vrot.slane %v52, 1
    %v54 = vadd.f32 %v52, %v53
    %v55 = vsel %vm31, %v47, 0.0
    %v56 = vrot.slane %v55, 4
    %v57 = vadd.f32 %v55, %v56
    %v58 = vrot.slane %v57, 2
    %v59 = vadd.f32 %v57, %v58
    %v60 = vrot.slane %v59, 1
    %v61 = vadd.f32 %v59, %v60
    %v62 = vmul.f32 %v38, 0.25
    %v63 = vmul.f32 %v45, 0.25
    %v64 = vmul.f32 %v54, 0.25
    %v65 = vmul.f32 %v61, 0.25
    %v66 = vmul.f32 %v62, %v62
    %v67 = vmul.f32 %v63, %v63
    %v68 = vsub.f32 %v64, %v66
    %v69 = vsub.f32 %v65, %v67
    %v70 = vmax.f32 %v68, 0.0
    %v71 = vmax.f32 %v69, 0.0
    %v72 = vadd.f32 %v70, 1e-05
    %v73 = vadd.f32 %v71, 1e-05
    %v74 = vrsqrt.pop %v72
    %v75 = vrsqrt.pop %v73
    %v76 = vsub.f32 %v27, %v62
    %v77 = vsub.f32 %v28, %v63
    %v78 = vmul.f32 %v76, %v74
    %v79 = vmul.f32 %v77, %v75
    %81 = vset.pattern.permute.xlu0 0
    %82 = vperm.xlu0 %81, %v29
    %v83 = vpop.permute.xlu0 %82
    %v85 = vmul.f32 %v78, %v83
    %v86 = vmul.f32 %v79, %v83
    %88 = vset.pattern.permute.xlu0 0
    %89 = vperm.xlu0 %88, %v30
    %v90 = vpop.permute.xlu0 %89
    %v92 = vadd.f32 %v85, %v90
    %v93 = vadd.f32 %v86, %v90
    %v96 = vrot.slane %v27, 4
    %v97 = vrot.slane %v28, 4
    %v100 = vsel %vm31, %v96, 0.0
    %v101 = vrot.slane %v100, 4
    %v102 = vadd.f32 %v100, %v101
    %v103 = vrot.slane %v102, 2
    %v104 = vadd.f32 %v102, %v103
    %v105 = vrot.slane %v104, 1
    %v106 = vadd.f32 %v104, %v105
    %v107 = vsel %vm31, %v97, 0.0
    %v108 = vrot.slane %v107, 4
    %v109 = vadd.f32 %v107, %v108
    %v110 = vrot.slane %v109, 2
    %v111 = vadd.f32 %v109, %v110
    %v112 = vrot.slane %v111, 1
    %v113 = vadd.f32 %v111, %v112
    %v116 = vrot.slane %v46, 4
    %v117 = vrot.slane %v47, 4
    %v120 = vsel %vm31, %v116, 0.0
    %v121 = vrot.slane %v120, 4
    %v122 = vadd.f32 %v120, %v121
    %v123 = vrot.slane %v122, 2
    %v124 = vadd.f32 %v122, %v123
    %v125 = vrot.slane %v124, 1
    %v126 = vadd.f32 %v124, %v125
    %v127 = vsel %vm31, %v117, 0.0
    %v128 = vrot.slane %v127, 4
    %v129 = vadd.f32 %v127, %v128
    %v130 = vrot.slane %v129, 2
    %v131 = vadd.f32 %v129, %v130
    %v132 = vrot.slane %v131, 1
    %v133 = vadd.f32 %v131, %v132
    %v134 = vmul.f32 %v106, 0.25
    %v135 = vmul.f32 %v113, 0.25
    %v136 = vmul.f32 %v126, 0.25
    %v137 = vmul.f32 %v133, 0.25
    %v138 = vmul.f32 %v134, %v134
    %v139 = vmul.f32 %v135, %v135
    %v140 = vsub.f32 %v136, %v138
    %v141 = vsub.f32 %v137, %v139
    %v142 = vmax.f32 %v140, 0.0
    %v143 = vmax.f32 %v141, 0.0
    %v144 = vadd.f32 %v142, 1e-05
    %v145 = vadd.f32 %v143, 1e-05
    %v146 = vrsqrt.pop %v144
    %v147 = vrsqrt.pop %v145
    %v148 = vsub.f32 %v27, %v134
    %v149 = vsub.f32 %v28, %v135
    %v150 = vmul.f32 %v148, %v146
    %v151 = vmul.f32 %v149, %v147
    %v152 = vrot.slane %v83, 4
    %v154 = vmul.f32 %v150, %v152
    %v155 = vmul.f32 %v151, %v152
    %v156 = vrot.slane %v90, 4
    %v158 = vadd.f32 %v154, %v156
    %v159 = vadd.f32 %v155, %v156
    %v160 = vsel %vm31, %v92, %v158
    %v161 = vsel %vm31, %v93, %v159
    %162 = vst [vmem:[#allocation5] sm:$0xff] %v160
    %163 = vst [vmem:[#allocation5 + $0x8] sm:$0xff] %v161
    // Predicated region
    $region18: #{tpu_custom_call.1} parent=1 // pred_check
      _
    $region19: #{tpu_custom_call.1} parent=1 // pred_check_branch
      %165 = sbr.rel (0) target = $region21
    $region20: #{tpu_custom_call.1} parent=1 // pred_region
      %s167 = ssub.s32 256, 256
      %168 = vsyncadd [#allocation4], %s167
      %s170 = sshll.u32 [#allocation5], 4
      %s171 = int_to_ptr.vmem [resolvable:$true] %s170
      %173 = dma.vmem_to_hbm [thread:$0]  %s171, 256, %s3, [#allocation4]
    $region21: #{tpu_custom_call.1} parent=1 // pred_fallthru
      _
    // Predicated region
    $region22: #{tpu_custom_call.1} parent=1 // pred_check
      _
    $region23: #{tpu_custom_call.1} parent=1 // pred_check_branch
      %175 = sbr.rel (0) target = $region25
    $region24: #{tpu_custom_call.1} parent=1 // pred_region
      %176 = dma.done [#allocation4], 256
    $region25: #{tpu_custom_call.1} parent=1 // pred_fallthru
      _
    %177 = vsyncpa [#allocation3], 1
    %178 = vsyncpa [#allocation4], 1

</llo_original>
